<compile_context>
chip_gen: v7x
topology: tpu7x:2x2x1
jax: 0.10.0
libtpu: 0.0.40
codegen_flags: <defaults>
</compile_context>

<pallas_src>
import jax
import jax.numpy as jnp
from jax.experimental import pallas as pl
from jax.experimental.pallas import tpu as pltpu


def mc_acquisition_kernel(ac_ref, x_ref, wr_ref, z_ref, out_ref):
    # ac_ref : (m+1, d)      fused [mean_m(A) ; C]^T  (row 0 = averaged mean head)
    # x_ref  : (q, d, TN)    per-q feature slabs, n tiled on lanes
    # wr_ref : (r, m)        w_options @ D   (grid-invariant, precomputed)
    # z_ref  : (q, S, m)     base samples, shared across the n batch dimension
    # out_ref: (1, TN)
    q = x_ref.shape[0]
    r, m = wr_ref.shape
    inv_rm = 1.0 / (r * m)

    wr = wr_ref[...]                                     # (r, m), tiny

    best = None
    for iq in range(q):                                  # static unroll, q small
        # fused surrogate matmul on the MXU: (m+1, d) @ (d, TN)
        mr = jnp.dot(ac_ref[...], x_ref[iq],
                     preferred_element_type=jnp.float32)  # (m+1, TN)
        mean_col = mr[0:1, :]                             # (1, TN)  = mean_m(X@A)
        rstd = mr[1:, :]                                  # (m, TN)  = X@C

        # sum over w-options of softplus(X@C + w@D): unrolled over r,
        # live intermediate stays (m, TN)
        sstd = jax.nn.softplus(rstd + wr[0][:, None])
        for ir in range(1, r):
            sstd = sstd + jax.nn.softplus(rstd + wr[ir][:, None])

        # MC-noise contraction over m on the MXU: (S, m) @ (m, TN) -> (S, TN)
        noise = jnp.dot(z_ref[iq], sstd,
                        preferred_element_type=jnp.float32)

        agg = mean_col + noise * inv_rm                   # (S, TN)
        best = agg if best is None else jnp.maximum(best, agg)   # running max over q

    # sample_reduction = mean over S  (the X-independent scalar mean of w@B is
    # added in the wrapper; it commutes through max-over-q and mean-over-S)
    out_ref[...] = jnp.mean(best, axis=0, keepdims=True)  # (1, TN)


def mc_acquisition_forward(X, w_options, A, B, C, D, Z, *, max_lane_tile=512):
    n, q, d = X.shape
    S, _, m = Z.shape
    r = w_options.shape[0]

    # ---- grid-invariant precompute (hoisted out of the kernel) --------------
    a_bar = jnp.mean(A, axis=1, keepdims=True)            # (d, 1): mean over m
    ac = jnp.concatenate([a_bar, C], axis=1).T            # (m+1, d)
    w_rstd = w_options @ D                                 # (r, m)
    wb = jnp.mean(w_options @ B)                           # scalar mean_{r,m}(w@B)

    # ---- layout plumbing: per-q slabs with n on the lane axis ---------------
    xq = jnp.transpose(X, (1, 2, 0))                       # (q, d, n)
    zq = jnp.transpose(Z, (1, 0, 2))                       # (q, S, m)

    # ---- lane tiling over n --------------------------------------------------
    if n <= max_lane_tile:
        tn, n_pad = n, n                                   # block == full dim
    else:
        tn = max_lane_tile                                 # multiple of 128
        n_pad = pl.cdiv(n, tn) * tn
        if n_pad != n:
            xq = jnp.pad(xq, ((0, 0), (0, 0), (0, n_pad - n)))
    grid = (n_pad // tn,)

    cost = pl.CostEstimate(
        flops=2 * (m + 1) * d * q * n_pad + 2 * S * m * q * n_pad,
        transcendentals=2 * r * m * q * n_pad,
        bytes_accessed=4 * (xq.size + ac.size + w_rstd.size + zq.size + n_pad),
    )

    out = pl.pallas_call(
        mc_acquisition_kernel,
        out_shape=jax.ShapeDtypeStruct((1, n_pad), jnp.float32),
        grid_spec=pltpu.PrefetchScalarGridSpec(
            num_scalar_prefetch=0,
            grid=grid,
            in_specs=[
                pl.BlockSpec((m + 1, d), lambda i: (0, 0)),     # small, constant
                pl.BlockSpec((q, d, tn), lambda i: (0, 0, i)),  # tiled over n
                pl.BlockSpec((r, m), lambda i: (0, 0)),         # small, constant
                pl.BlockSpec((q, S, m), lambda i: (0, 0, 0)),   # small, constant
            ],
            out_specs=pl.BlockSpec((1, tn), lambda i: (0, i)),
        ),
        compiler_params=pltpu.CompilerParams(
            dimension_semantics=("parallel",),       # n tiles independent -> 2 TCs on v7x
            vmem_limit_bytes=32 * 1024 * 1024,       # fits v5e/v6e/v7x budgets
        ),
        cost_estimate=cost,
    )(ac, xq, w_rstd, zq)

    return out[0, :n] + wb


def mc_acquisition_reference(X, w_options, A, B, C, D, Z):
    # Original (uncollapsed) math: materializes the full (S,n,q,r,m) tensor.
    n, q, dim = X.shape
    r = w_options.shape[0]
    S, _, m = Z.shape
    xf = X.reshape(n * q, dim)
    mean = (xf @ A)[:, None, :] + (w_options @ B)[None, :, :]
    std = jax.nn.softplus((xf @ C)[:, None, :] + (w_options @ D)[None, :, :])
    mean = mean.reshape(n, q, r, m)
    std = std.reshape(n, q, r, m)
    samples = mean[None] + std[None] * Z[:, None, :, None, :]
    aggregated = jnp.mean(samples, axis=(3, 4))
    return jnp.mean(jnp.max(aggregated, axis=-1), axis=0)


if __name__ == "__main__":
    # small shapes: n=8 candidate batches, q=4 points, d=16 features,
    # r=3 w-options with w_dim=4 params, m=2 model outputs, S=3 MC samples
    n, q, d = 8, 4, 16
    r, w_dim = 3, 4
    m, S = 2, 3

    key = jax.random.PRNGKey(0)
    kx, kw, ka, kb, kc, kd, kz = jax.random.split(key, 7)

    X = jax.random.normal(kx, (n, q, d), dtype=jnp.float32)
    w_options = jax.random.uniform(kw, (r, w_dim), dtype=jnp.float32)

    # deterministic synthetic surrogate parameters
    A = 0.1 * jax.random.normal(ka, (d, m), dtype=jnp.float32)
    B = 0.1 * jax.random.normal(kb, (w_dim, m), dtype=jnp.float32)
    C = 0.05 * jax.random.normal(kc, (d, m), dtype=jnp.float32)
    D = 0.05 * jax.random.normal(kd, (w_dim, m), dtype=jnp.float32)

    # TODO(synk): true Sobol QMC normal base samples have no Pallas equivalent;
    # deterministic pseudo-normal base samples are used instead.
    Z = jax.random.normal(kz, (S, q, m), dtype=jnp.float32)

    out = mc_acquisition_forward(X, w_options, A, B, C, D, Z)
    jax.block_until_ready(out)

    ref = mc_acquisition_reference(X, w_options, A, B, C, D, Z)
    assert out.shape == (n,)
    assert jnp.allclose(out, ref, atol=1e-5, rtol=1e-5)

    print("KERNEL_OK")
</pallas_src>

<mosaic_0001>
module attributes {stable_mosaic.version = 11 : i64} {
  func.func @mc_acquisition_kernel(%arg0: i32, %arg1: memref<3x16xf32, #tpu.memory_space<vmem>>, %arg2: memref<4x16x8xf32, #tpu.memory_space<vmem>>, %arg3: memref<3x2xf32, #tpu.memory_space<vmem>>, %arg4: memref<4x3x2xf32, #tpu.memory_space<vmem>>, %arg5: memref<1x8xf32, #tpu.memory_space<vmem>>) attributes {dimension_semantics = [#tpu.dimension_semantics<parallel>], iteration_bounds = array<i64: 1>, scalar_prefetch = 0 : i64, scratch_operands = 0 : i64, tpu.core_type = #tpu.core_type<tc>, window_params = [{pipeline_mode = #tpu.pipeline_mode<synchronous>, transform_indices = @transform_0, window_bounds = array<i64: 3, 16>}, {transform_indices = @transform_1, window_bounds = array<i64: 4, 16, 8>}, {pipeline_mode = #tpu.pipeline_mode<synchronous>, transform_indices = @transform_2, window_bounds = array<i64: 3, 2>}, {pipeline_mode = #tpu.pipeline_mode<synchronous>, transform_indices = @transform_3, window_bounds = array<i64: 4, 3, 2>}, {transform_indices = @transform_4, window_bounds = array<i64: 1, 8>}]} {
    %c0 = arith.constant 0 : index
    %c0_0 = arith.constant 0 : index
    %0 = vector.load %arg3[%c0, %c0_0] : memref<3x2xf32, #tpu.memory_space<vmem>>, vector<3x2xf32>
    %c0_1 = arith.constant 0 : index
    %c0_2 = arith.constant 0 : index
    %1 = vector.load %arg1[%c0_1, %c0_2] : memref<3x16xf32, #tpu.memory_space<vmem>>, vector<3x16xf32>
    %c0_3 = arith.constant 0 : index
    %c0_4 = arith.constant 0 : index
    %c0_5 = arith.constant 0 : index
    %2 = vector.load %arg2[%c0_3, %c0_4, %c0_5] : memref<4x16x8xf32, #tpu.memory_space<vmem>>, vector<1x16x8xf32>
    %3 = vector.shape_cast %2 : vector<1x16x8xf32> to vector<16x8xf32>
    %cst = arith.constant dense<0.000000e+00> : vector<3x8xf32>
    %4 = tpu.matmul %1, %3, %cst {dimension_numbers = #tpu.dot_dimension_numbers<[1], [0], [0], [1], [0, 0, 1, 1], [], []>} : vector<3x16xf32>, vector<16x8xf32>, vector<3x8xf32> -> vector<3x8xf32>
    %5 = vector.extract_strided_slice %4 {offsets = [0, 0], sizes = [1, 8], strides = [1, 1]} : vector<3x8xf32> to vector<1x8xf32>
    %6 = vector.extract_strided_slice %4 {offsets = [1, 0], sizes = [2, 8], strides = [1, 1]} : vector<3x8xf32> to vector<2x8xf32>
    %7 = vector.extract_strided_slice %0 {offsets = [0, 0], sizes = [1, 2], strides = [1, 1]} : vector<3x2xf32> to vector<1x2xf32>
    %8 = vector.shape_cast %7 : vector<1x2xf32> to vector<2xf32>
    %9 = vector.shape_cast %8 : vector<2xf32> to vector<2x1xf32>
    %10 = vector.broadcast %9 : vector<2x1xf32> to vector<2x8xf32>
    %11 = arith.addf %6, %10 : vector<2x8xf32>
    %cst_6 = arith.constant 0.000000e+00 : f32
    %12 = vector.broadcast %cst_6 : f32 to vector<2x8xf32>
    %13 = arith.maximumf %11, %12 : vector<2x8xf32>
    %14 = vector.broadcast %cst_6 : f32 to vector<2x8xf32>
    %15 = arith.subf %11, %14 : vector<2x8xf32>
    %16 = arith.cmpf one, %15, %15 : vector<2x8xf32>
    %17 = vector.broadcast %cst_6 : f32 to vector<2x8xf32>
    %18 = arith.addf %11, %17 : vector<2x8xf32>
    %19 = math.absf %15 : vector<2x8xf32>
    %cst_7 = arith.constant 0.000000e+00 : f32
    %20 = vector.broadcast %cst_7 : f32 to vector<2x8xf32>
    %21 = arith.subf %20, %19 : vector<2x8xf32>
    %22 = math.exp %21 : vector<2x8xf32>
    %23 = math.log1p %22 : vector<2x8xf32>
    %24 = arith.addf %13, %23 : vector<2x8xf32>
    %25 = arith.select %16, %18, %24 : vector<2x8xi1>, vector<2x8xf32>
    %26 = vector.extract_strided_slice %0 {offsets = [1, 0], sizes = [1, 2], strides = [1, 1]} : vector<3x2xf32> to vector<1x2xf32>
    %27 = vector.shape_cast %26 : vector<1x2xf32> to vector<2xf32>
    %28 = vector.shape_cast %27 : vector<2xf32> to vector<2x1xf32>
    %29 = vector.broadcast %28 : vector<2x1xf32> to vector<2x8xf32>
    %30 = arith.addf %6, %29 : vector<2x8xf32>
    %cst_8 = arith.constant 0.000000e+00 : f32
    %31 = vector.broadcast %cst_8 : f32 to vector<2x8xf32>
    %32 = arith.maximumf %30, %31 : vector<2x8xf32>
    %33 = vector.broadcast %cst_8 : f32 to vector<2x8xf32>
    %34 = arith.subf %30, %33 : vector<2x8xf32>
    %35 = arith.cmpf one, %34, %34 : vector<2x8xf32>
    %36 = vector.broadcast %cst_8 : f32 to vector<2x8xf32>
    %37 = arith.addf %30, %36 : vector<2x8xf32>
    %38 = math.absf %34 : vector<2x8xf32>
    %cst_9 = arith.constant 0.000000e+00 : f32
    %39 = vector.broadcast %cst_9 : f32 to vector<2x8xf32>
    %40 = arith.subf %39, %38 : vector<2x8xf32>
    %41 = math.exp %40 : vector<2x8xf32>
    %42 = math.log1p %41 : vector<2x8xf32>
    %43 = arith.addf %32, %42 : vector<2x8xf32>
    %44 = arith.select %35, %37, %43 : vector<2x8xi1>, vector<2x8xf32>
    %45 = arith.addf %25, %44 : vector<2x8xf32>
    %46 = vector.extract_strided_slice %0 {offsets = [2, 0], sizes = [1, 2], strides = [1, 1]} : vector<3x2xf32> to vector<1x2xf32>
    %47 = vector.shape_cast %46 : vector<1x2xf32> to vector<2xf32>
    %48 = vector.shape_cast %47 : vector<2xf32> to vector<2x1xf32>
    %49 = vector.broadcast %48 : vector<2x1xf32> to vector<2x8xf32>
    %50 = arith.addf %6, %49 : vector<2x8xf32>
    %cst_10 = arith.constant 0.000000e+00 : f32
    %51 = vector.broadcast %cst_10 : f32 to vector<2x8xf32>
    %52 = arith.maximumf %50, %51 : vector<2x8xf32>
    %53 = vector.broadcast %cst_10 : f32 to vector<2x8xf32>
    %54 = arith.subf %50, %53 : vector<2x8xf32>
    %55 = arith.cmpf one, %54, %54 : vector<2x8xf32>
    %56 = vector.broadcast %cst_10 : f32 to vector<2x8xf32>
    %57 = arith.addf %50, %56 : vector<2x8xf32>
    %58 = math.absf %54 : vector<2x8xf32>
    %cst_11 = arith.constant 0.000000e+00 : f32
    %59 = vector.broadcast %cst_11 : f32 to vector<2x8xf32>
    %60 = arith.subf %59, %58 : vector<2x8xf32>
    %61 = math.exp %60 : vector<2x8xf32>
    %62 = math.log1p %61 : vector<2x8xf32>
    %63 = arith.addf %52, %62 : vector<2x8xf32>
    %64 = arith.select %55, %57, %63 : vector<2x8xi1>, vector<2x8xf32>
    %65 = arith.addf %45, %64 : vector<2x8xf32>
    %c0_12 = arith.constant 0 : index
    %c0_13 = arith.constant 0 : index
    %c0_14 = arith.constant 0 : index
    %66 = vector.load %arg4[%c0_12, %c0_13, %c0_14] : memref<4x3x2xf32, #tpu.memory_space<vmem>>, vector<1x3x2xf32>
    %67 = vector.shape_cast %66 : vector<1x3x2xf32> to vector<3x2xf32>
    %cst_15 = arith.constant dense<0.000000e+00> : vector<3x8xf32>
    %68 = tpu.matmul %67, %65, %cst_15 {dimension_numbers = #tpu.dot_dimension_numbers<[1], [0], [0], [1], [0, 0, 1, 1], [], []>} : vector<3x2xf32>, vector<2x8xf32>, vector<3x8xf32> -> vector<3x8xf32>
    %cst_16 = arith.constant 0.166666672 : f32
    %69 = vector.broadcast %cst_16 : f32 to vector<3x8xf32>
    %70 = arith.mulf %68, %69 : vector<3x8xf32>
    %71 = vector.broadcast %5 : vector<1x8xf32> to vector<3x8xf32>
    %72 = arith.addf %71, %70 : vector<3x8xf32>
    %c0_17 = arith.constant 0 : index
    %c0_18 = arith.constant 0 : index
    %73 = vector.load %arg1[%c0_17, %c0_18] : memref<3x16xf32, #tpu.memory_space<vmem>>, vector<3x16xf32>
    %c1 = arith.constant 1 : index
    %c0_19 = arith.constant 0 : index
    %c0_20 = arith.constant 0 : index
    %74 = vector.load %arg2[%c1, %c0_19, %c0_20] : memref<4x16x8xf32, #tpu.memory_space<vmem>>, vector<1x16x8xf32>
    %75 = vector.shape_cast %74 : vector<1x16x8xf32> to vector<16x8xf32>
    %cst_21 = arith.constant dense<0.000000e+00> : vector<3x8xf32>
    %76 = tpu.matmul %73, %75, %cst_21 {dimension_numbers = #tpu.dot_dimension_numbers<[1], [0], [0], [1], [0, 0, 1, 1], [], []>} : vector<3x16xf32>, vector<16x8xf32>, vector<3x8xf32> -> vector<3x8xf32>
    %77 = vector.extract_strided_slice %76 {offsets = [0, 0], sizes = [1, 8], strides = [1, 1]} : vector<3x8xf32> to vector<1x8xf32>
    %78 = vector.extract_strided_slice %76 {offsets = [1, 0], sizes = [2, 8], strides = [1, 1]} : vector<3x8xf32> to vector<2x8xf32>
    %79 = vector.extract_strided_slice %0 {offsets = [0, 0], sizes = [1, 2], strides = [1, 1]} : vector<3x2xf32> to vector<1x2xf32>
    %80 = vector.shape_cast %79 : vector<1x2xf32> to vector<2xf32>
    %81 = vector.shape_cast %80 : vector<2xf32> to vector<2x1xf32>
    %82 = vector.broadcast %81 : vector<2x1xf32> to vector<2x8xf32>
    %83 = arith.addf %78, %82 : vector<2x8xf32>
    %cst_22 = arith.constant 0.000000e+00 : f32
    %84 = vector.broadcast %cst_22 : f32 to vector<2x8xf32>
    %85 = arith.maximumf %83, %84 : vector<2x8xf32>
    %86 = vector.broadcast %cst_22 : f32 to vector<2x8xf32>
    %87 = arith.subf %83, %86 : vector<2x8xf32>
    %88 = arith.cmpf one, %87, %87 : vector<2x8xf32>
    %89 = vector.broadcast %cst_22 : f32 to vector<2x8xf32>
    %90 = arith.addf %83, %89 : vector<2x8xf32>
    %91 = math.absf %87 : vector<2x8xf32>
    %cst_23 = arith.constant 0.000000e+00 : f32
    %92 = vector.broadcast %cst_23 : f32 to vector<2x8xf32>
    %93 = arith.subf %92, %91 : vector<2x8xf32>
    %94 = math.exp %93 : vector<2x8xf32>
    %95 = math.log1p %94 : vector<2x8xf32>
    %96 = arith.addf %85, %95 : vector<2x8xf32>
    %97 = arith.select %88, %90, %96 : vector<2x8xi1>, vector<2x8xf32>
    %98 = vector.extract_strided_slice %0 {offsets = [1, 0], sizes = [1, 2], strides = [1, 1]} : vector<3x2xf32> to vector<1x2xf32>
    %99 = vector.shape_cast %98 : vector<1x2xf32> to vector<2xf32>
    %100 = vector.shape_cast %99 : vector<2xf32> to vector<2x1xf32>
    %101 = vector.broadcast %100 : vector<2x1xf32> to vector<2x8xf32>
    %102 = arith.addf %78, %101 : vector<2x8xf32>
    %cst_24 = arith.constant 0.000000e+00 : f32
    %103 = vector.broadcast %cst_24 : f32 to vector<2x8xf32>
    %104 = arith.maximumf %102, %103 : vector<2x8xf32>
    %105 = vector.broadcast %cst_24 : f32 to vector<2x8xf32>
    %106 = arith.subf %102, %105 : vector<2x8xf32>
    %107 = arith.cmpf one, %106, %106 : vector<2x8xf32>
    %108 = vector.broadcast %cst_24 : f32 to vector<2x8xf32>
    %109 = arith.addf %102, %108 : vector<2x8xf32>
    %110 = math.absf %106 : vector<2x8xf32>
    %cst_25 = arith.constant 0.000000e+00 : f32
    %111 = vector.broadcast %cst_25 : f32 to vector<2x8xf32>
    %112 = arith.subf %111, %110 : vector<2x8xf32>
    %113 = math.exp %112 : vector<2x8xf32>
    %114 = math.log1p %113 : vector<2x8xf32>
    %115 = arith.addf %104, %114 : vector<2x8xf32>
    %116 = arith.select %107, %109, %115 : vector<2x8xi1>, vector<2x8xf32>
    %117 = arith.addf %97, %116 : vector<2x8xf32>
    %118 = vector.extract_strided_slice %0 {offsets = [2, 0], sizes = [1, 2], strides = [1, 1]} : vector<3x2xf32> to vector<1x2xf32>
    %119 = vector.shape_cast %118 : vector<1x2xf32> to vector<2xf32>
    %120 = vector.shape_cast %119 : vector<2xf32> to vector<2x1xf32>
    %121 = vector.broadcast %120 : vector<2x1xf32> to vector<2x8xf32>
    %122 = arith.addf %78, %121 : vector<2x8xf32>
    %cst_26 = arith.constant 0.000000e+00 : f32
    %123 = vector.broadcast %cst_26 : f32 to vector<2x8xf32>
    %124 = arith.maximumf %122, %123 : vector<2x8xf32>
    %125 = vector.broadcast %cst_26 : f32 to vector<2x8xf32>
    %126 = arith.subf %122, %125 : vector<2x8xf32>
    %127 = arith.cmpf one, %126, %126 : vector<2x8xf32>
    %128 = vector.broadcast %cst_26 : f32 to vector<2x8xf32>
    %129 = arith.addf %122, %128 : vector<2x8xf32>
    %130 = math.absf %126 : vector<2x8xf32>
    %cst_27 = arith.constant 0.000000e+00 : f32
    %131 = vector.broadcast %cst_27 : f32 to vector<2x8xf32>
    %132 = arith.subf %131, %130 : vector<2x8xf32>
    %133 = math.exp %132 : vector<2x8xf32>
    %134 = math.log1p %133 : vector<2x8xf32>
    %135 = arith.addf %124, %134 : vector<2x8xf32>
    %136 = arith.select %127, %129, %135 : vector<2x8xi1>, vector<2x8xf32>
    %137 = arith.addf %117, %136 : vector<2x8xf32>
    %c1_28 = arith.constant 1 : index
    %c0_29 = arith.constant 0 : index
    %c0_30 = arith.constant 0 : index
    %138 = vector.load %arg4[%c1_28, %c0_29, %c0_30] : memref<4x3x2xf32, #tpu.memory_space<vmem>>, vector<1x3x2xf32>
    %139 = vector.shape_cast %138 : vector<1x3x2xf32> to vector<3x2xf32>
    %cst_31 = arith.constant dense<0.000000e+00> : vector<3x8xf32>
    %140 = tpu.matmul %139, %137, %cst_31 {dimension_numbers = #tpu.dot_dimension_numbers<[1], [0], [0], [1], [0, 0, 1, 1], [], []>} : vector<3x2xf32>, vector<2x8xf32>, vector<3x8xf32> -> vector<3x8xf32>
    %cst_32 = arith.constant 0.166666672 : f32
    %141 = vector.broadcast %cst_32 : f32 to vector<3x8xf32>
    %142 = arith.mulf %140, %141 : vector<3x8xf32>
    %143 = vector.broadcast %77 : vector<1x8xf32> to vector<3x8xf32>
    %144 = arith.addf %143, %142 : vector<3x8xf32>
    %145 = arith.maximumf %72, %144 : vector<3x8xf32>
    %c0_33 = arith.constant 0 : index
    %c0_34 = arith.constant 0 : index
    %146 = vector.load %arg1[%c0_33, %c0_34] : memref<3x16xf32, #tpu.memory_space<vmem>>, vector<3x16xf32>
    %c2 = arith.constant 2 : index
    %c0_35 = arith.constant 0 : index
    %c0_36 = arith.constant 0 : index
    %147 = vector.load %arg2[%c2, %c0_35, %c0_36] : memref<4x16x8xf32, #tpu.memory_space<vmem>>, vector<1x16x8xf32>
    %148 = vector.shape_cast %147 : vector<1x16x8xf32> to vector<16x8xf32>
    %cst_37 = arith.constant dense<0.000000e+00> : vector<3x8xf32>
    %149 = tpu.matmul %146, %148, %cst_37 {dimension_numbers = #tpu.dot_dimension_numbers<[1], [0], [0], [1], [0, 0, 1, 1], [], []>} : vector<3x16xf32>, vector<16x8xf32>, vector<3x8xf32> -> vector<3x8xf32>
    %150 = vector.extract_strided_slice %149 {offsets = [0, 0], sizes = [1, 8], strides = [1, 1]} : vector<3x8xf32> to vector<1x8xf32>
    %151 = vector.extract_strided_slice %149 {offsets = [1, 0], sizes = [2, 8], strides = [1, 1]} : vector<3x8xf32> to vector<2x8xf32>
    %152 = vector.extract_strided_slice %0 {offsets = [0, 0], sizes = [1, 2], strides = [1, 1]} : vector<3x2xf32> to vector<1x2xf32>
    %153 = vector.shape_cast %152 : vector<1x2xf32> to vector<2xf32>
    %154 = vector.shape_cast %153 : vector<2xf32> to vector<2x1xf32>
    %155 = vector.broadcast %154 : vector<2x1xf32> to vector<2x8xf32>
    %156 = arith.addf %151, %155 : vector<2x8xf32>
    %cst_38 = arith.constant 0.000000e+00 : f32
    %157 = vector.broadcast %cst_38 : f32 to vector<2x8xf32>
    %158 = arith.maximumf %156, %157 : vector<2x8xf32>
    %159 = vector.broadcast %cst_38 : f32 to vector<2x8xf32>
    %160 = arith.subf %156, %159 : vector<2x8xf32>
    %161 = arith.cmpf one, %160, %160 : vector<2x8xf32>
    %162 = vector.broadcast %cst_38 : f32 to vector<2x8xf32>
    %163 = arith.addf %156, %162 : vector<2x8xf32>
    %164 = math.absf %160 : vector<2x8xf32>
    %cst_39 = arith.constant 0.000000e+00 : f32
    %165 = vector.broadcast %cst_39 : f32 to vector<2x8xf32>
    %166 = arith.subf %165, %164 : vector<2x8xf32>
    %167 = math.exp %166 : vector<2x8xf32>
    %168 = math.log1p %167 : vector<2x8xf32>
    %169 = arith.addf %158, %168 : vector<2x8xf32>
    %170 = arith.select %161, %163, %169 : vector<2x8xi1>, vector<2x8xf32>
    %171 = vector.extract_strided_slice %0 {offsets = [1, 0], sizes = [1, 2], strides = [1, 1]} : vector<3x2xf32> to vector<1x2xf32>
    %172 = vector.shape_cast %171 : vector<1x2xf32> to vector<2xf32>
    %173 = vector.shape_cast %172 : vector<2xf32> to vector<2x1xf32>
    %174 = vector.broadcast %173 : vector<2x1xf32> to vector<2x8xf32>
    %175 = arith.addf %151, %174 : vector<2x8xf32>
    %cst_40 = arith.constant 0.000000e+00 : f32
    %176 = vector.broadcast %cst_40 : f32 to vector<2x8xf32>
    %177 = arith.maximumf %175, %176 : vector<2x8xf32>
    %178 = vector.broadcast %cst_40 : f32 to vector<2x8xf32>
    %179 = arith.subf %175, %178 : vector<2x8xf32>
    %180 = arith.cmpf one, %179, %179 : vector<2x8xf32>
    %181 = vector.broadcast %cst_40 : f32 to vector<2x8xf32>
    %182 = arith.addf %175, %181 : vector<2x8xf32>
    %183 = math.absf %179 : vector<2x8xf32>
    %cst_41 = arith.constant 0.000000e+00 : f32
    %184 = vector.broadcast %cst_41 : f32 to vector<2x8xf32>
    %185 = arith.subf %184, %183 : vector<2x8xf32>
    %186 = math.exp %185 : vector<2x8xf32>
    %187 = math.log1p %186 : vector<2x8xf32>
    %188 = arith.addf %177, %187 : vector<2x8xf32>
    %189 = arith.select %180, %182, %188 : vector<2x8xi1>, vector<2x8xf32>
    %190 = arith.addf %170, %189 : vector<2x8xf32>
    %191 = vector.extract_strided_slice %0 {offsets = [2, 0], sizes = [1, 2], strides = [1, 1]} : vector<3x2xf32> to vector<1x2xf32>
    %192 = vector.shape_cast %191 : vector<1x2xf32> to vector<2xf32>
    %193 = vector.shape_cast %192 : vector<2xf32> to vector<2x1xf32>
    %194 = vector.broadcast %193 : vector<2x1xf32> to vector<2x8xf32>
    %195 = arith.addf %151, %194 : vector<2x8xf32>
    %cst_42 = arith.constant 0.000000e+00 : f32
    %196 = vector.broadcast %cst_42 : f32 to vector<2x8xf32>
    %197 = arith.maximumf %195, %196 : vector<2x8xf32>
    %198 = vector.broadcast %cst_42 : f32 to vector<2x8xf32>
    %199 = arith.subf %195, %198 : vector<2x8xf32>
    %200 = arith.cmpf one, %199, %199 : vector<2x8xf32>
    %201 = vector.broadcast %cst_42 : f32 to vector<2x8xf32>
    %202 = arith.addf %195, %201 : vector<2x8xf32>
    %203 = math.absf %199 : vector<2x8xf32>
    %cst_43 = arith.constant 0.000000e+00 : f32
    %204 = vector.broadcast %cst_43 : f32 to vector<2x8xf32>
    %205 = arith.subf %204, %203 : vector<2x8xf32>
    %206 = math.exp %205 : vector<2x8xf32>
    %207 = math.log1p %206 : vector<2x8xf32>
    %208 = arith.addf %197, %207 : vector<2x8xf32>
    %209 = arith.select %200, %202, %208 : vector<2x8xi1>, vector<2x8xf32>
    %210 = arith.addf %190, %209 : vector<2x8xf32>
    %c2_44 = arith.constant 2 : index
    %c0_45 = arith.constant 0 : index
    %c0_46 = arith.constant 0 : index
    %211 = vector.load %arg4[%c2_44, %c0_45, %c0_46] : memref<4x3x2xf32, #tpu.memory_space<vmem>>, vector<1x3x2xf32>
    %212 = vector.shape_cast %211 : vector<1x3x2xf32> to vector<3x2xf32>
    %cst_47 = arith.constant dense<0.000000e+00> : vector<3x8xf32>
    %213 = tpu.matmul %212, %210, %cst_47 {dimension_numbers = #tpu.dot_dimension_numbers<[1], [0], [0], [1], [0, 0, 1, 1], [], []>} : vector<3x2xf32>, vector<2x8xf32>, vector<3x8xf32> -> vector<3x8xf32>
    %cst_48 = arith.constant 0.166666672 : f32
    %214 = vector.broadcast %cst_48 : f32 to vector<3x8xf32>
    %215 = arith.mulf %213, %214 : vector<3x8xf32>
    %216 = vector.broadcast %150 : vector<1x8xf32> to vector<3x8xf32>
    %217 = arith.addf %216, %215 : vector<3x8xf32>
    %218 = arith.maximumf %145, %217 : vector<3x8xf32>
    %c0_49 = arith.constant 0 : index
    %c0_50 = arith.constant 0 : index
    %219 = vector.load %arg1[%c0_49, %c0_50] : memref<3x16xf32, #tpu.memory_space<vmem>>, vector<3x16xf32>
    %c3 = arith.constant 3 : index
    %c0_51 = arith.constant 0 : index
    %c0_52 = arith.constant 0 : index
    %220 = vector.load %arg2[%c3, %c0_51, %c0_52] : memref<4x16x8xf32, #tpu.memory_space<vmem>>, vector<1x16x8xf32>
    %221 = vector.shape_cast %220 : vector<1x16x8xf32> to vector<16x8xf32>
    %cst_53 = arith.constant dense<0.000000e+00> : vector<3x8xf32>
    %222 = tpu.matmul %219, %221, %cst_53 {dimension_numbers = #tpu.dot_dimension_numbers<[1], [0], [0], [1], [0, 0, 1, 1], [], []>} : vector<3x16xf32>, vector<16x8xf32>, vector<3x8xf32> -> vector<3x8xf32>
    %223 = vector.extract_strided_slice %222 {offsets = [0, 0], sizes = [1, 8], strides = [1, 1]} : vector<3x8xf32> to vector<1x8xf32>
    %224 = vector.extract_strided_slice %222 {offsets = [1, 0], sizes = [2, 8], strides = [1, 1]} : vector<3x8xf32> to vector<2x8xf32>
    %225 = vector.extract_strided_slice %0 {offsets = [0, 0], sizes = [1, 2], strides = [1, 1]} : vector<3x2xf32> to vector<1x2xf32>
    %226 = vector.shape_cast %225 : vector<1x2xf32> to vector<2xf32>
    %227 = vector.shape_cast %226 : vector<2xf32> to vector<2x1xf32>
    %228 = vector.broadcast %227 : vector<2x1xf32> to vector<2x8xf32>
    %229 = arith.addf %224, %228 : vector<2x8xf32>
    %cst_54 = arith.constant 0.000000e+00 : f32
    %230 = vector.broadcast %cst_54 : f32 to vector<2x8xf32>
    %231 = arith.maximumf %229, %230 : vector<2x8xf32>
    %232 = vector.broadcast %cst_54 : f32 to vector<2x8xf32>
    %233 = arith.subf %229, %232 : vector<2x8xf32>
    %234 = arith.cmpf one, %233, %233 : vector<2x8xf32>
    %235 = vector.broadcast %cst_54 : f32 to vector<2x8xf32>
    %236 = arith.addf %229, %235 : vector<2x8xf32>
    %237 = math.absf %233 : vector<2x8xf32>
    %cst_55 = arith.constant 0.000000e+00 : f32
    %238 = vector.broadcast %cst_55 : f32 to vector<2x8xf32>
    %239 = arith.subf %238, %237 : vector<2x8xf32>
    %240 = math.exp %239 : vector<2x8xf32>
    %241 = math.log1p %240 : vector<2x8xf32>
    %242 = arith.addf %231, %241 : vector<2x8xf32>
    %243 = arith.select %234, %236, %242 : vector<2x8xi1>, vector<2x8xf32>
    %244 = vector.extract_strided_slice %0 {offsets = [1, 0], sizes = [1, 2], strides = [1, 1]} : vector<3x2xf32> to vector<1x2xf32>
    %245 = vector.shape_cast %244 : vector<1x2xf32> to vector<2xf32>
    %246 = vector.shape_cast %245 : vector<2xf32> to vector<2x1xf32>
    %247 = vector.broadcast %246 : vector<2x1xf32> to vector<2x8xf32>
    %248 = arith.addf %224, %247 : vector<2x8xf32>
    %cst_56 = arith.constant 0.000000e+00 : f32
    %249 = vector.broadcast %cst_56 : f32 to vector<2x8xf32>
    %250 = arith.maximumf %248, %249 : vector<2x8xf32>
    %251 = vector.broadcast %cst_56 : f32 to vector<2x8xf32>
    %252 = arith.subf %248, %251 : vector<2x8xf32>
    %253 = arith.cmpf one, %252, %252 : vector<2x8xf32>
    %254 = vector.broadcast %cst_56 : f32 to vector<2x8xf32>
    %255 = arith.addf %248, %254 : vector<2x8xf32>
    %256 = math.absf %252 : vector<2x8xf32>
    %cst_57 = arith.constant 0.000000e+00 : f32
    %257 = vector.broadcast %cst_57 : f32 to vector<2x8xf32>
    %258 = arith.subf %257, %256 : vector<2x8xf32>
    %259 = math.exp %258 : vector<2x8xf32>
    %260 = math.log1p %259 : vector<2x8xf32>
    %261 = arith.addf %250, %260 : vector<2x8xf32>
    %262 = arith.select %253, %255, %261 : vector<2x8xi1>, vector<2x8xf32>
    %263 = arith.addf %243, %262 : vector<2x8xf32>
    %264 = vector.extract_strided_slice %0 {offsets = [2, 0], sizes = [1, 2], strides = [1, 1]} : vector<3x2xf32> to vector<1x2xf32>
    %265 = vector.shape_cast %264 : vector<1x2xf32> to vector<2xf32>
    %266 = vector.shape_cast %265 : vector<2xf32> to vector<2x1xf32>
    %267 = vector.broadcast %266 : vector<2x1xf32> to vector<2x8xf32>
    %268 = arith.addf %224, %267 : vector<2x8xf32>
    %cst_58 = arith.constant 0.000000e+00 : f32
    %269 = vector.broadcast %cst_58 : f32 to vector<2x8xf32>
    %270 = arith.maximumf %268, %269 : vector<2x8xf32>
    %271 = vector.broadcast %cst_58 : f32 to vector<2x8xf32>
    %272 = arith.subf %268, %271 : vector<2x8xf32>
    %273 = arith.cmpf one, %272, %272 : vector<2x8xf32>
    %274 = vector.broadcast %cst_58 : f32 to vector<2x8xf32>
    %275 = arith.addf %268, %274 : vector<2x8xf32>
    %276 = math.absf %272 : vector<2x8xf32>
    %cst_59 = arith.constant 0.000000e+00 : f32
    %277 = vector.broadcast %cst_59 : f32 to vector<2x8xf32>
    %278 = arith.subf %277, %276 : vector<2x8xf32>
    %279 = math.exp %278 : vector<2x8xf32>
    %280 = math.log1p %279 : vector<2x8xf32>
    %281 = arith.addf %270, %280 : vector<2x8xf32>
    %282 = arith.select %273, %275, %281 : vector<2x8xi1>, vector<2x8xf32>
    %283 = arith.addf %263, %282 : vector<2x8xf32>
    %c3_60 = arith.constant 3 : index
    %c0_61 = arith.constant 0 : index
    %c0_62 = arith.constant 0 : index
    %284 = vector.load %arg4[%c3_60, %c0_61, %c0_62] : memref<4x3x2xf32, #tpu.memory_space<vmem>>, vector<1x3x2xf32>
    %285 = vector.shape_cast %284 : vector<1x3x2xf32> to vector<3x2xf32>
    %cst_63 = arith.constant dense<0.000000e+00> : vector<3x8xf32>
    %286 = tpu.matmul %285, %283, %cst_63 {dimension_numbers = #tpu.dot_dimension_numbers<[1], [0], [0], [1], [0, 0, 1, 1], [], []>} : vector<3x2xf32>, vector<2x8xf32>, vector<3x8xf32> -> vector<3x8xf32>
    %cst_64 = arith.constant 0.166666672 : f32
    %287 = vector.broadcast %cst_64 : f32 to vector<3x8xf32>
    %288 = arith.mulf %286, %287 : vector<3x8xf32>
    %289 = vector.broadcast %223 : vector<1x8xf32> to vector<3x8xf32>
    %290 = arith.addf %289, %288 : vector<3x8xf32>
    %291 = arith.maximumf %218, %290 : vector<3x8xf32>
    %cst_65 = arith.constant dense<0.000000e+00> : vector<8xf32>
    %292 = vector.multi_reduction <add>, %291, %cst_65 [0] : vector<3x8xf32> to vector<8xf32>
    %293 = vector.shape_cast %292 : vector<8xf32> to vector<1x8xf32>
    %cst_66 = arith.constant 3.000000e+00 : f32
    %294 = vector.broadcast %cst_66 : f32 to vector<1x8xf32>
    %295 = arith.divf %293, %294 : vector<1x8xf32>
    %c0_67 = arith.constant 0 : index
    %c0_68 = arith.constant 0 : index
    %296 = vector.load %arg5[%c0_67, %c0_68] : memref<1x8xf32, #tpu.memory_space<vmem>>, vector<1x8xf32>
    tpu.vector_store %arg5[%c0_67, %c0_68], %295 {strides = array<i32>} : memref<1x8xf32, #tpu.memory_space<vmem>>, vector<1x8xf32>,
    return
  }
  func.func @transform_0(%arg0: i32) -> (i32, i32) {
    %c0_i32 = arith.constant 0 : i32
    %c0_i32_0 = arith.constant 0 : i32
    %c0_i32_1 = arith.constant 0 : i32
    return %c0_i32, %c0_i32_0 : i32, i32
  }
  func.func @transform_1(%arg0: i32) -> (i32, i32, i32) {
    %c0_i32 = arith.constant 0 : i32
    %c0_i32_0 = arith.constant 0 : i32
    %c0_i32_1 = arith.constant 0 : i32
    return %c0_i32, %c0_i32_0, %arg0 : i32, i32, i32
  }
  func.func @transform_2(%arg0: i32) -> (i32, i32) {
    %c0_i32 = arith.constant 0 : i32
    %c0_i32_0 = arith.constant 0 : i32
    %c0_i32_1 = arith.constant 0 : i32
    return %c0_i32, %c0_i32_0 : i32, i32
  }
  func.func @transform_3(%arg0: i32) -> (i32, i32, i32) {
    %c0_i32 = arith.constant 0 : i32
    %c0_i32_0 = arith.constant 0 : i32
    %c0_i32_1 = arith.constant 0 : i32
    %c0_i32_2 = arith.constant 0 : i32
    return %c0_i32, %c0_i32_0, %c0_i32_1 : i32, i32, i32
  }
  func.func @transform_4(%arg0: i32) -> (i32, i32) {
    %c0_i32 = arith.constant 0 : i32
    %c0_i32_0 = arith.constant 0 : i32
    return %c0_i32, %arg0 : i32, i32
  }
}

</mosaic_0001>

<llo_original>
// kernel: tpu_custom_call.1
$region0: #{tpu_custom_call.1}
  #allocation0 [shape = 'u32[]', space=smem, size = 0x4, offset = 0x4, fixed_abs, tag = 'smem constant byte address 0x4 - core index']
  #allocation1 [shape = 'u32[144,128]{1,0:T(1,128)}', space=vmem, size = 0x12000, scoped, tag = 'internal scratch']
  %s0 = inlined_call_operand.vmem [shape: f32[3,16], index: 0, kind: input, shape index: {}]
  %s1 = inlined_call_operand.vmem [shape: f32[4,16,8], index: 1, kind: input, shape index: {}]
  %s2 = inlined_call_operand.vmem [shape: f32[3,2], index: 2, kind: input, shape index: {}]
  %s3 = inlined_call_operand.vmem [shape: f32[4,3,2], index: 3, kind: input, shape index: {}]
  %s4 = inlined_call_operand.hbm [shape: f32[1,8], index: 4, kind: output, shape index: {}]
  %s5 = sld [smem:[#allocation0]]
  $region26: #{tpu_custom_call.1} parent=0
    _
  %s7 = ssub.s32 1, %s5
  %s8 = scalar_select 0, %s7, %s5
  $region1: #{tpu_custom_call.1} parent=0
    #allocation2 [shape = 'u8[512]{0}', space=vmem, size = 0x400, scoped, tag = 'output window, operand 0, single buffered']
    #allocation3 [shape = 's32[1]{0}', space=sflag, size = 0x4, scoped, tag = 'scoped memory for tpu_custom_call.1']
    %9 = vsyncpa [#allocation3], 0
    // Predicated region
    $region2: #{tpu_custom_call.1} parent=1 // pred_check
      _
    $region3: #{tpu_custom_call.1} parent=1 // pred_check_branch
      %11 = sbr.rel (0) target = $region5
    $region4: #{tpu_custom_call.1} parent=1 // pred_region
      _
    $region5: #{tpu_custom_call.1} parent=1 // pred_fallthru
      _
    // Predicated region
    $region6: #{tpu_custom_call.1} parent=1 // pred_check
      _
    $region7: #{tpu_custom_call.1} parent=1 // pred_check_branch
      %13 = sbr.rel (0) target = $region9
    $region8: #{tpu_custom_call.1} parent=1 // pred_region
      _
    $region9: #{tpu_custom_call.1} parent=1 // pred_fallthru
      _
    // Predicated region
    $region10: #{tpu_custom_call.1} parent=1 // pred_check
      _
    $region11: #{tpu_custom_call.1} parent=1 // pred_check_branch
      %15 = sbr.rel (0) target = $region13
    $region12: #{tpu_custom_call.1} parent=1 // pred_region
      _
    $region13: #{tpu_custom_call.1} parent=1 // pred_fallthru
      _
    // Predicated region
    $region14: #{tpu_custom_call.1} parent=1 // pred_check
      _
    $region15: #{tpu_custom_call.1} parent=1 // pred_check_branch
      %17 = sbr.rel (0) target = $region17
    $region16: #{tpu_custom_call.1} parent=1 // pred_region
      _
    $region17: #{tpu_custom_call.1} parent=1 // pred_fallthru
      _
    %v18 = vld [vmem:[%s2] sm:$0x7]
    %v19 = vld [vmem:[%s0] sm:$0x7]
    %v20 = vld [vmem:[%s1] sm:$0xff]
    %v21 = vld [vmem:[%s1 + $0x8] sm:$0xff]
    %vm22 = vcmask 130048
    %v24 = vsel %vm22, %v19, 0
    %26 = vmatprep.subr.mxu0 0.0
    %27 = vmatpush1.msra.mxu0 %v20
    %28 = vmatprep.subr.mxu0 0.0
    %29 = vmatpush1.msra.mxu0 %v21
    %30 = vmatprep.subr.mxu0 0.0
    %31 = vmatpush1.msra.mxu0 0.0
    %32 = vmatprep.subr.mxu0 0.0
    %33 = vmatpush1.msra.mxu0 0.0
    %34 = vmatprep.subr.mxu0 0.0
    %35 = vmatpush1.msra.mxu0 0.0
    %36 = vmatprep.subr.mxu0 0.0
    %37 = vmatpush1.msra.mxu0 0.0
    %38 = vmatprep.subr.mxu0 0.0
    %39 = vmatpush1.msra.mxu0 0.0
    %40 = vmatprep.subr.mxu0 0.0
    %41 = vmatpush1.msra.mxu0 0.0
    %42 = vmatprep.subr.mxu0 0.0
    %43 = vmatpush1.msra.mxu0 0.0
    %44 = vmatprep.subr.mxu0 0.0
    %45 = vmatpush1.msra.mxu0 0.0
    %46 = vmatprep.subr.mxu0 0.0
    %47 = vmatpush1.msra.mxu0 0.0
    %48 = vmatprep.subr.mxu0 0.0
    %49 = vmatpush1.msra.mxu0 0.0
    %50 = vmatprep.subr.mxu0 0.0
    %51 = vmatpush1.msra.mxu0 0.0
    %52 = vmatprep.subr.mxu0 0.0
    %53 = vmatpush1.msra.mxu0 0.0
    %54 = vmatprep.subr.mxu0 0.0
    %55 = vmatpush1.msra.mxu0 0.0
    %56 = vmatprep.subr.mxu0 0.0
    %57 = vmatpush1.msra.mxu0 0.0
    %58 = vmatprep.subr.mxu0 0.0
    %59 = vmatpush1.msra.mxu0 0.0
    %60 = vmatprep.subr.mxu0 0.0
    %61 = vmatpush1.msra.mxu0 0.0
    %62 = vmatprep.subr.mxu0 0.0
    %63 = vmatpush1.msra.mxu0 0.0
    %64 = vmatprep.subr.mxu0 0.0
    %65 = vmatpush1.msra.mxu0 0.0
    %66 = vmatprep.subr.mxu0 0.0
    %67 = vmatpush1.msra.mxu0 0.0
    %68 = vmatprep.subr.mxu0 0.0
    %69 = vmatpush1.msra.mxu0 0.0
    %70 = vmatprep.subr.mxu0 0.0
    %71 = vmatpush1.msra.mxu0 0.0
    %72 = vmatprep.subr.mxu0 0.0
    %73 = vmatpush1.msra.mxu0 0.0
    %74 = vmatprep.subr.mxu0 0.0
    %75 = vmatpush1.msra.mxu0 0.0
    %76 = vmatprep.subr.mxu0 0.0
    %77 = vmatpush1.msra.mxu0 0.0
    %78 = vmatprep.subr.mxu0 0.0
    %79 = vmatpush1.msra.mxu0 0.0
    %80 = vmatprep.subr.mxu0 0.0
    %81 = vmatpush1.msra.mxu0 0.0
    %82 = vmatprep.subr.mxu0 0.0
    %83 = vmatpush1.msra.mxu0 0.0
    %84 = vmatprep.subr.mxu0 0.0
    %85 = vmatpush1.msra.mxu0 0.0
    %86 = vmatprep.subr.mxu0 0.0
    %87 = vmatpush1.msra.mxu0 0.0
    %88 = vmatprep.subr.mxu0 0.0
    %89 = vmatpush1.msra.mxu0 0.0
    %90 = vmatprep.mubr.f32.mxu0 0.0
    %91 = vmatmul.mubr.f32.gmra.mrb[0].mxu0 %v24
    %v92 = vpop.f32.mrb[0].mxu0
    %v93 = vadd.f32 0.0, %v92
    %v94 = vpop.f32.mrb[0].mxu0
    %95 = vdwg.mxu0
    %v96 = vlaneseq
    %v97 = vshrl.u32 %v96, 7
    %v98 = vsub.s32 0, %v97
    %v99 = vrot.slane %v18, %v98
    %101 = vbcast.lane.b32.xlu0 %v99, 256
    %v102 = vpop.permute.xlu0 %101
    %v104 = vrot.slane %v102, 7
    %v106 = vadd.f32 %v93, %v104
    %v107 = vmax.f32 %v106, 0.0
    %vm108 = vcmp.ne.f32.partialorder %v106, %v106
    %v109 = vadd.f32 %v106, 0.0
    %v110 = vand.u32 2147483647, %v106
    %v111 = vsub.f32 0.0, %v110
    %v112 = vmul.f32 %v111, 1.442695
    %v113 = vpow.pop %v112
    %v114 = vadd.f32 %v113, 1.0
    %v115 = vlog2.pop %v114
    %v116 = vmul.f32 %v115, 0.6931472
    %v117 = vmul.f32 -0.5, %v113
    %v118 = vadd.f32 %v117, 1.0
    %v119 = vmul.f32 %v118, %v113
    %v120 = vand.u32 2147483647, %v113
    %vm121 = vcmp.lt.f32.partialorder %v120, 0.0004427343
    %v122 = vsel %vm121, %v119, %v116
    %v123 = vadd.f32 %v107, %v122
    %v124 = vsel %vm108, %v109, %v123
    %v125 = vlaneseq
    %v126 = vshrl.u32 %v125, 7
    %v127 = vsub.s32 1, %v126
    %v128 = vrot.slane %v18, %v127
    %130 = vbcast.lane.b32.xlu0 %v128, 256
    %v131 = vpop.permute.xlu0 %130
    %v133 = vrot.slane %v131, 7
    %v135 = vadd.f32 %v93, %v133
    %v136 = vmax.f32 %v135, 0.0
    %vm137 = vcmp.ne.f32.partialorder %v135, %v135
    %v138 = vadd.f32 %v135, 0.0
    %v139 = vand.u32 2147483647, %v135
    %v140 = vsub.f32 0.0, %v139
    %v141 = vmul.f32 %v140, 1.442695
    %v142 = vpow.pop %v141
    %v143 = vadd.f32 %v142, 1.0
    %v144 = vlog2.pop %v143
    %v145 = vmul.f32 %v144, 0.6931472
    %v146 = vmul.f32 -0.5, %v142
    %v147 = vadd.f32 %v146, 1.0
    %v148 = vmul.f32 %v147, %v142
    %v149 = vand.u32 2147483647, %v142
    %vm150 = vcmp.lt.f32.partialorder %v149, 0.0004427343
    %v151 = vsel %vm150, %v148, %v145
    %v152 = vadd.f32 %v136, %v151
    %v153 = vsel %vm137, %v138, %v152
    %v154 = vadd.f32 %v124, %v153
    %v155 = vlaneseq
    %v156 = vshrl.u32 %v155, 7
    %v157 = vsub.s32 2, %v156
    %v158 = vrot.slane %v18, %v157
    %160 = vbcast.lane.b32.xlu0 %v158, 256
    %v161 = vpop.permute.xlu0 %160
    %v163 = vrot.slane %v161, 7
    %v165 = vadd.f32 %v93, %v163
    %v166 = vmax.f32 %v165, 0.0
    %vm167 = vcmp.ne.f32.partialorder %v165, %v165
    %v168 = vadd.f32 %v165, 0.0
    %v169 = vand.u32 2147483647, %v165
    %v170 = vsub.f32 0.0, %v169
    %v171 = vmul.f32 %v170, 1.442695
    %v172 = vpow.pop %v171
    %v173 = vadd.f32 %v172, 1.0
    %v174 = vlog2.pop %v173
    %v175 = vmul.f32 %v174, 0.6931472
    %v176 = vmul.f32 -0.5, %v172
    %v177 = vadd.f32 %v176, 1.0
    %v178 = vmul.f32 %v177, %v172
    %v179 = vand.u32 2147483647, %v172
    %vm180 = vcmp.lt.f32.partialorder %v179, 0.0004427343
    %v181 = vsel %vm180, %v178, %v175
    %v182 = vadd.f32 %v166, %v181
    %v183 = vsel %vm167, %v168, %v182
    %v184 = vadd.f32 %v154, %v183
    %v185 = vld [vmem:[%s3] sm:$0x7]
    %v187 = vrot.slane %v184, 1
    %vm188 = vcmask 15360
    %v190 = vsel %vm188, %v185, 0
    %vm192 = vcmask 1041408
    %v193 = vsel %vm192, %v187, 0
    %195 = vmatprep.subr.mxu0 0.0
    %196 = vmatpush1.msra.mxu0 %v193
    %197 = vmatprep.subr.mxu0 0.0
    %198 = vmatpush1.msra.mxu0 0.0
    %199 = vmatprep.subr.mxu0 0.0
    %200 = vmatpush1.msra.mxu0 0.0
    %201 = vmatprep.subr.mxu0 0.0
    %202 = vmatpush1.msra.mxu0 0.0
    %203 = vmatprep.subr.mxu0 0.0
    %204 = vmatpush1.msra.mxu0 0.0
    %205 = vmatprep.subr.mxu0 0.0
    %206 = vmatpush1.msra.mxu0 0.0
    %207 = vmatprep.subr.mxu0 0.0
    %208 = vmatpush1.msra.mxu0 0.0
    %209 = vmatprep.subr.mxu0 0.0
    %210 = vmatpush1.msra.mxu0 0.0
    %211 = vmatprep.subr.mxu0 0.0
    %212 = vmatpush1.msra.mxu0 0.0
    %213 = vmatprep.subr.mxu0 0.0
    %214 = vmatpush1.msra.mxu0 0.0
    %215 = vmatprep.subr.mxu0 0.0
    %216 = vmatpush1.msra.mxu0 0.0
    %217 = vmatprep.subr.mxu0 0.0
    %218 = vmatpush1.msra.mxu0 0.0
    %219 = vmatprep.subr.mxu0 0.0
    %220 = vmatpush1.msra.mxu0 0.0
    %221 = vmatprep.subr.mxu0 0.0
    %222 = vmatpush1.msra.mxu0 0.0
    %223 = vmatprep.subr.mxu0 0.0
    %224 = vmatpush1.msra.mxu0 0.0
    %225 = vmatprep.subr.mxu0 0.0
    %226 = vmatpush1.msra.mxu0 0.0
    %227 = vmatprep.subr.mxu0 0.0
    %228 = vmatpush1.msra.mxu0 0.0
    %229 = vmatprep.subr.mxu0 0.0
    %230 = vmatpush1.msra.mxu0 0.0
    %231 = vmatprep.subr.mxu0 0.0
    %232 = vmatpush1.msra.mxu0 0.0
    %233 = vmatprep.subr.mxu0 0.0
    %234 = vmatpush1.msra.mxu0 0.0
    %235 = vmatprep.subr.mxu0 0.0
    %236 = vmatpush1.msra.mxu0 0.0
    %237 = vmatprep.subr.mxu0 0.0
    %238 = vmatpush1.msra.mxu0 0.0
    %239 = vmatprep.subr.mxu0 0.0
    %240 = vmatpush1.msra.mxu0 0.0
    %241 = vmatprep.subr.mxu0 0.0
    %242 = vmatpush1.msra.mxu0 0.0
    %243 = vmatprep.subr.mxu0 0.0
    %244 = vmatpush1.msra.mxu0 0.0
    %245 = vmatprep.subr.mxu0 0.0
    %246 = vmatpush1.msra.mxu0 0.0
    %247 = vmatprep.subr.mxu0 0.0
    %248 = vmatpush1.msra.mxu0 0.0
    %249 = vmatprep.subr.mxu0 0.0
    %250 = vmatpush1.msra.mxu0 0.0
    %251 = vmatprep.subr.mxu0 0.0
    %252 = vmatpush1.msra.mxu0 0.0
    %253 = vmatprep.subr.mxu0 0.0
    %254 = vmatpush1.msra.mxu0 0.0
    %255 = vmatprep.subr.mxu0 0.0
    %256 = vmatpush1.msra.mxu0 0.0
    %257 = vmatprep.subr.mxu0 0.0
    %258 = vmatpush1.msra.mxu0 0.0
    %259 = vmatprep.mubr.f32.mxu0 0.0
    %260 = vmatmul.mubr.f32.gmra.mrb[0].mxu0 %v190
    %v261 = vpop.f32.mrb[0].mxu0
    %v262 = vadd.f32 0.0, %v261
    %v263 = vpop.f32.mrb[0].mxu0
    %264 = vdwg.mxu0
    %v265 = vmul.f32 %v262, 0.16666667
    %v266 = vlaneseq
    %v267 = vshrl.u32 %v266, 7
    %v268 = vsub.s32 0, %v267
    %v269 = vrot.slane %v93, %v268
    %v270 = vadd.f32 %v269, %v265
    %s271 = scalar_lea.vmem %s1, 16
    %v272 = vld [vmem:[%s271] sm:$0xff]
    %v273 = vld [vmem:[%s271 + $0x8] sm:$0xff]
    %274 = vmatprep.subr.mxu0 0.0
    %275 = vmatpush1.msra.mxu0 %v272
    %276 = vmatprep.subr.mxu0 0.0
    %277 = vmatpush1.msra.mxu0 %v273
    %278 = vmatprep.subr.mxu0 0.0
    %279 = vmatpush1.msra.mxu0 0.0
    %280 = vmatprep.subr.mxu0 0.0
    %281 = vmatpush1.msra.mxu0 0.0
    %282 = vmatprep.subr.mxu0 0.0
    %283 = vmatpush1.msra.mxu0 0.0
    %284 = vmatprep.subr.mxu0 0.0
    %285 = vmatpush1.msra.mxu0 0.0
    %286 = vmatprep.subr.mxu0 0.0
    %287 = vmatpush1.msra.mxu0 0.0
    %288 = vmatprep.subr.mxu0 0.0
    %289 = vmatpush1.msra.mxu0 0.0
    %290 = vmatprep.subr.mxu0 0.0
    %291 = vmatpush1.msra.mxu0 0.0
    %292 = vmatprep.subr.mxu0 0.0
    %293 = vmatpush1.msra.mxu0 0.0
    %294 = vmatprep.subr.mxu0 0.0
    %295 = vmatpush1.msra.mxu0 0.0
    %296 = vmatprep.subr.mxu0 0.0
    %297 = vmatpush1.msra.mxu0 0.0
    %298 = vmatprep.subr.mxu0 0.0
    %299 = vmatpush1.msra.mxu0 0.0
    %300 = vmatprep.subr.mxu0 0.0
    %301 = vmatpush1.msra.mxu0 0.0
    %302 = vmatprep.subr.mxu0 0.0
    %303 = vmatpush1.msra.mxu0 0.0
    %304 = vmatprep.subr.mxu0 0.0
    %305 = vmatpush1.msra.mxu0 0.0
    %306 = vmatprep.subr.mxu0 0.0
    %307 = vmatpush1.msra.mxu0 0.0
    %308 = vmatprep.subr.mxu0 0.0
    %309 = vmatpush1.msra.mxu0 0.0
    %310 = vmatprep.subr.mxu0 0.0
    %311 = vmatpush1.msra.mxu0 0.0
    %312 = vmatprep.subr.mxu0 0.0
    %313 = vmatpush1.msra.mxu0 0.0
    %314 = vmatprep.subr.mxu0 0.0
    %315 = vmatpush1.msra.mxu0 0.0
    %316 = vmatprep.subr.mxu0 0.0
    %317 = vmatpush1.msra.mxu0 0.0
    %318 = vmatprep.subr.mxu0 0.0
    %319 = vmatpush1.msra.mxu0 0.0
    %320 = vmatprep.subr.mxu0 0.0
    %321 = vmatpush1.msra.mxu0 0.0
    %322 = vmatprep.subr.mxu0 0.0
    %323 = vmatpush1.msra.mxu0 0.0
    %324 = vmatprep.subr.mxu0 0.0
    %325 = vmatpush1.msra.mxu0 0.0
    %326 = vmatprep.subr.mxu0 0.0
    %327 = vmatpush1.msra.mxu0 0.0
    %328 = vmatprep.subr.mxu0 0.0
    %329 = vmatpush1.msra.mxu0 0.0
    %330 = vmatprep.subr.mxu0 0.0
    %331 = vmatpush1.msra.mxu0 0.0
    %332 = vmatprep.subr.mxu0 0.0
    %333 = vmatpush1.msra.mxu0 0.0
    %334 = vmatprep.subr.mxu0 0.0
    %335 = vmatpush1.msra.mxu0 0.0
    %336 = vmatprep.subr.mxu0 0.0
    %337 = vmatpush1.msra.mxu0 0.0
    %338 = vmatprep.mubr.f32.mxu0 0.0
    %339 = vmatmul.mubr.f32.gmra.mrb[0].mxu0 %v24
    %v340 = vpop.f32.mrb[0].mxu0
    %v341 = vadd.f32 0.0, %v340
    %v342 = vpop.f32.mrb[0].mxu0
    %343 = vdwg.mxu0
    %v344 = vadd.f32 %v341, %v104
    %v345 = vmax.f32 %v344, 0.0
    %vm346 = vcmp.ne.f32.partialorder %v344, %v344
    %v347 = vadd.f32 %v344, 0.0
    %v348 = vand.u32 2147483647, %v344
    %v349 = vsub.f32 0.0, %v348
    %v350 = vmul.f32 %v349, 1.442695
    %v351 = vpow.pop %v350
    %v352 = vadd.f32 %v351, 1.0
    %v353 = vlog2.pop %v352
    %v354 = vmul.f32 %v353, 0.6931472
    %v355 = vmul.f32 -0.5, %v351
    %v356 = vadd.f32 %v355, 1.0
    %v357 = vmul.f32 %v356, %v351
    %v358 = vand.u32 2147483647, %v351
    %vm359 = vcmp.lt.f32.partialorder %v358, 0.0004427343
    %v360 = vsel %vm359, %v357, %v354
    %v361 = vadd.f32 %v345, %v360
    %v362 = vsel %vm346, %v347, %v361
    %v363 = vadd.f32 %v341, %v133
    %v364 = vmax.f32 %v363, 0.0
    %vm365 = vcmp.ne.f32.partialorder %v363, %v363
    %v366 = vadd.f32 %v363, 0.0
    %v367 = vand.u32 2147483647, %v363
    %v368 = vsub.f32 0.0, %v367
    %v369 = vmul.f32 %v368, 1.442695
    %v370 = vpow.pop %v369
    %v371 = vadd.f32 %v370, 1.0
    %v372 = vlog2.pop %v371
    %v373 = vmul.f32 %v372, 0.6931472
    %v374 = vmul.f32 -0.5, %v370
    %v375 = vadd.f32 %v374, 1.0
    %v376 = vmul.f32 %v375, %v370
    %v377 = vand.u32 2147483647, %v370
    %vm378 = vcmp.lt.f32.partialorder %v377, 0.0004427343
    %v379 = vsel %vm378, %v376, %v373
    %v380 = vadd.f32 %v364, %v379
    %v381 = vsel %vm365, %v366, %v380
    %v382 = vadd.f32 %v362, %v381
    %v383 = vadd.f32 %v341, %v163
    %v384 = vmax.f32 %v383, 0.0
    %vm385 = vcmp.ne.f32.partialorder %v383, %v383
    %v386 = vadd.f32 %v383, 0.0
    %v387 = vand.u32 2147483647, %v383
    %v388 = vsub.f32 0.0, %v387
    %v389 = vmul.f32 %v388, 1.442695
    %v390 = vpow.pop %v389
    %v391 = vadd.f32 %v390, 1.0
    %v392 = vlog2.pop %v391
    %v393 = vmul.f32 %v392, 0.6931472
    %v394 = vmul.f32 -0.5, %v390
    %v395 = vadd.f32 %v394, 1.0
    %v396 = vmul.f32 %v395, %v390
    %v397 = vand.u32 2147483647, %v390
    %vm398 = vcmp.lt.f32.partialorder %v397, 0.0004427343
    %v399 = vsel %vm398, %v396, %v393
    %v400 = vadd.f32 %v384, %v399
    %v401 = vsel %vm385, %v386, %v400
    %v402 = vadd.f32 %v382, %v401
    %s403 = scalar_lea.vmem %s3, 4
    %v404 = vld [vmem:[%s403] sm:$0x7]
    %v406 = vrot.slane %v402, 1
    %v408 = vsel %vm188, %v404, 0
    %v410 = vsel %vm192, %v406, 0
    %412 = vmatprep.subr.mxu0 0.0
    %413 = vmatpush1.msra.mxu0 %v410
    %414 = vmatprep.subr.mxu0 0.0
    %415 = vmatpush1.msra.mxu0 0.0
    %416 = vmatprep.subr.mxu0 0.0
    %417 = vmatpush1.msra.mxu0 0.0
    %418 = vmatprep.subr.mxu0 0.0
    %419 = vmatpush1.msra.mxu0 0.0
    %420 = vmatprep.subr.mxu0 0.0
    %421 = vmatpush1.msra.mxu0 0.0
    %422 = vmatprep.subr.mxu0 0.0
    %423 = vmatpush1.msra.mxu0 0.0
    %424 = vmatprep.subr.mxu0 0.0
    %425 = vmatpush1.msra.mxu0 0.0
    %426 = vmatprep.subr.mxu0 0.0
    %427 = vmatpush1.msra.mxu0 0.0
    %428 = vmatprep.subr.mxu0 0.0
    %429 = vmatpush1.msra.mxu0 0.0
    %430 = vmatprep.subr.mxu0 0.0
    %431 = vmatpush1.msra.mxu0 0.0
    %432 = vmatprep.subr.mxu0 0.0
    %433 = vmatpush1.msra.mxu0 0.0
    %434 = vmatprep.subr.mxu0 0.0
    %435 = vmatpush1.msra.mxu0 0.0
    %436 = vmatprep.subr.mxu0 0.0
    %437 = vmatpush1.msra.mxu0 0.0
    %438 = vmatprep.subr.mxu0 0.0
    %439 = vmatpush1.msra.mxu0 0.0
    %440 = vmatprep.subr.mxu0 0.0
    %441 = vmatpush1.msra.mxu0 0.0
    %442 = vmatprep.subr.mxu0 0.0
    %443 = vmatpush1.msra.mxu0 0.0
    %444 = vmatprep.subr.mxu0 0.0
    %445 = vmatpush1.msra.mxu0 0.0
    %446 = vmatprep.subr.mxu0 0.0
    %447 = vmatpush1.msra.mxu0 0.0
    %448 = vmatprep.subr.mxu0 0.0
    %449 = vmatpush1.msra.mxu0 0.0
    %450 = vmatprep.subr.mxu0 0.0
    %451 = vmatpush1.msra.mxu0 0.0
    %452 = vmatprep.subr.mxu0 0.0
    %453 = vmatpush1.msra.mxu0 0.0
    %454 = vmatprep.subr.mxu0 0.0
    %455 = vmatpush1.msra.mxu0 0.0
    %456 = vmatprep.subr.mxu0 0.0
    %457 = vmatpush1.msra.mxu0 0.0
    %458 = vmatprep.subr.mxu0 0.0
    %459 = vmatpush1.msra.mxu0 0.0
    %460 = vmatprep.subr.mxu0 0.0
    %461 = vmatpush1.msra.mxu0 0.0
    %462 = vmatprep.subr.mxu0 0.0
    %463 = vmatpush1.msra.mxu0 0.0
    %464 = vmatprep.subr.mxu0 0.0
    %465 = vmatpush1.msra.mxu0 0.0
    %466 = vmatprep.subr.mxu0 0.0
    %467 = vmatpush1.msra.mxu0 0.0
    %468 = vmatprep.subr.mxu0 0.0
    %469 = vmatpush1.msra.mxu0 0.0
    %470 = vmatprep.subr.mxu0 0.0
    %471 = vmatpush1.msra.mxu0 0.0
    %472 = vmatprep.subr.mxu0 0.0
    %473 = vmatpush1.msra.mxu0 0.0
    %474 = vmatprep.subr.mxu0 0.0
    %475 = vmatpush1.msra.mxu0 0.0
    %476 = vmatprep.mubr.f32.mxu0 0.0
    %477 = vmatmul.mubr.f32.gmra.mrb[0].mxu0 %v408
    %v478 = vpop.f32.mrb[0].mxu0
    %v479 = vadd.f32 0.0, %v478
    %v480 = vpop.f32.mrb[0].mxu0
    %481 = vdwg.mxu0
    %v482 = vmul.f32 %v479, 0.16666667
    %v483 = vlaneseq
    %v484 = vshrl.u32 %v483, 7
    %v485 = vsub.s32 0, %v484
    %v486 = vrot.slane %v341, %v485
    %v487 = vadd.f32 %v486, %v482
    %v488 = vmax.f32 %v270, %v487
    %s489 = scalar_lea.vmem %s1, 32
    %v490 = vld [vmem:[%s489] sm:$0xff]
    %v491 = vld [vmem:[%s489 + $0x8] sm:$0xff]
    %492 = vmatprep.subr.mxu0 0.0
    %493 = vmatpush1.msra.mxu0 %v490
    %494 = vmatprep.subr.mxu0 0.0
    %495 = vmatpush1.msra.mxu0 %v491
    %496 = vmatprep.subr.mxu0 0.0
    %497 = vmatpush1.msra.mxu0 0.0
    %498 = vmatprep.subr.mxu0 0.0
    %499 = vmatpush1.msra.mxu0 0.0
    %500 = vmatprep.subr.mxu0 0.0
    %501 = vmatpush1.msra.mxu0 0.0
    %502 = vmatprep.subr.mxu0 0.0
    %503 = vmatpush1.msra.mxu0 0.0
    %504 = vmatprep.subr.mxu0 0.0
    %505 = vmatpush1.msra.mxu0 0.0
    %506 = vmatprep.subr.mxu0 0.0
    %507 = vmatpush1.msra.mxu0 0.0
    %508 = vmatprep.subr.mxu0 0.0
    %509 = vmatpush1.msra.mxu0 0.0
    %510 = vmatprep.subr.mxu0 0.0
    %511 = vmatpush1.msra.mxu0 0.0
    %512 = vmatprep.subr.mxu0 0.0
    %513 = vmatpush1.msra.mxu0 0.0
    %514 = vmatprep.subr.mxu0 0.0
    %515 = vmatpush1.msra.mxu0 0.0
    %516 = vmatprep.subr.mxu0 0.0
    %517 = vmatpush1.msra.mxu0 0.0
    %518 = vmatprep.subr.mxu0 0.0
    %519 = vmatpush1.msra.mxu0 0.0
    %520 = vmatprep.subr.mxu0 0.0
    %521 = vmatpush1.msra.mxu0 0.0
    %522 = vmatprep.subr.mxu0 0.0
    %523 = vmatpush1.msra.mxu0 0.0
    %524 = vmatprep.subr.mxu0 0.0
    %525 = vmatpush1.msra.mxu0 0.0
    %526 = vmatprep.subr.mxu0 0.0
    %527 = vmatpush1.msra.mxu0 0.0
    %528 = vmatprep.subr.mxu0 0.0
    %529 = vmatpush1.msra.mxu0 0.0
    %530 = vmatprep.subr.mxu0 0.0
    %531 = vmatpush1.msra.mxu0 0.0
    %532 = vmatprep.subr.mxu0 0.0
    %533 = vmatpush1.msra.mxu0 0.0
    %534 = vmatprep.subr.mxu0 0.0
    %535 = vmatpush1.msra.mxu0 0.0
    %536 = vmatprep.subr.mxu0 0.0
    %537 = vmatpush1.msra.mxu0 0.0
    %538 = vmatprep.subr.mxu0 0.0
    %539 = vmatpush1.msra.mxu0 0.0
    %540 = vmatprep.subr.mxu0 0.0
    %541 = vmatpush1.msra.mxu0 0.0
    %542 = vmatprep.subr.mxu0 0.0
    %543 = vmatpush1.msra.mxu0 0.0
    %544 = vmatprep.subr.mxu0 0.0
    %545 = vmatpush1.msra.mxu0 0.0
    %546 = vmatprep.subr.mxu0 0.0
    %547 = vmatpush1.msra.mxu0 0.0
    %548 = vmatprep.subr.mxu0 0.0
    %549 = vmatpush1.msra.mxu0 0.0
    %550 = vmatprep.subr.mxu0 0.0
    %551 = vmatpush1.msra.mxu0 0.0
    %552 = vmatprep.subr.mxu0 0.0
    %553 = vmatpush1.msra.mxu0 0.0
    %554 = vmatprep.subr.mxu0 0.0
    %555 = vmatpush1.msra.mxu0 0.0
    %556 = vmatprep.mubr.f32.mxu0 0.0
    %557 = vmatmul.mubr.f32.gmra.mrb[0].mxu0 %v24
    %v558 = vpop.f32.mrb[0].mxu0
    %v559 = vadd.f32 0.0, %v558
    %v560 = vpop.f32.mrb[0].mxu0
    %561 = vdwg.mxu0
    %v562 = vadd.f32 %v559, %v104
    %v563 = vmax.f32 %v562, 0.0
    %vm564 = vcmp.ne.f32.partialorder %v562, %v562
    %v565 = vadd.f32 %v562, 0.0
    %v566 = vand.u32 2147483647, %v562
    %v567 = vsub.f32 0.0, %v566
    %v568 = vmul.f32 %v567, 1.442695
    %v569 = vpow.pop %v568
    %v570 = vadd.f32 %v569, 1.0
    %v571 = vlog2.pop %v570
    %v572 = vmul.f32 %v571, 0.6931472
    %v573 = vmul.f32 -0.5, %v569
    %v574 = vadd.f32 %v573, 1.0
    %v575 = vmul.f32 %v574, %v569
    %v576 = vand.u32 2147483647, %v569
    %vm577 = vcmp.lt.f32.partialorder %v576, 0.0004427343
    %v578 = vsel %vm577, %v575, %v572
    %v579 = vadd.f32 %v563, %v578
    %v580 = vsel %vm564, %v565, %v579
    %v581 = vadd.f32 %v559, %v133
    %v582 = vmax.f32 %v581, 0.0
    %vm583 = vcmp.ne.f32.partialorder %v581, %v581
    %v584 = vadd.f32 %v581, 0.0
    %v585 = vand.u32 2147483647, %v581
    %v586 = vsub.f32 0.0, %v585
    %v587 = vmul.f32 %v586, 1.442695
    %v588 = vpow.pop %v587
    %v589 = vadd.f32 %v588, 1.0
    %v590 = vlog2.pop %v589
    %v591 = vmul.f32 %v590, 0.6931472
    %v592 = vmul.f32 -0.5, %v588
    %v593 = vadd.f32 %v592, 1.0
    %v594 = vmul.f32 %v593, %v588
    %v595 = vand.u32 2147483647, %v588
    %vm596 = vcmp.lt.f32.partialorder %v595, 0.0004427343
    %v597 = vsel %vm596, %v594, %v591
    %v598 = vadd.f32 %v582, %v597
    %v599 = vsel %vm583, %v584, %v598
    %v600 = vadd.f32 %v580, %v599
    %v601 = vadd.f32 %v559, %v163
    %v602 = vmax.f32 %v601, 0.0
    %vm603 = vcmp.ne.f32.partialorder %v601, %v601
    %v604 = vadd.f32 %v601, 0.0
    %v605 = vand.u32 2147483647, %v601
    %v606 = vsub.f32 0.0, %v605
    %v607 = vmul.f32 %v606, 1.442695
    %v608 = vpow.pop %v607
    %v609 = vadd.f32 %v608, 1.0
    %v610 = vlog2.pop %v609
    %v611 = vmul.f32 %v610, 0.6931472
    %v612 = vmul.f32 -0.5, %v608
    %v613 = vadd.f32 %v612, 1.0
    %v614 = vmul.f32 %v613, %v608
    %v615 = vand.u32 2147483647, %v608
    %vm616 = vcmp.lt.f32.partialorder %v615, 0.0004427343
    %v617 = vsel %vm616, %v614, %v611
    %v618 = vadd.f32 %v602, %v617
    %v619 = vsel %vm603, %v604, %v618
    %v620 = vadd.f32 %v600, %v619
    %s621 = scalar_lea.vmem %s3, 8
    %v622 = vld [vmem:[%s621] sm:$0x7]
    %v624 = vrot.slane %v620, 1
    %v626 = vsel %vm188, %v622, 0
    %v628 = vsel %vm192, %v624, 0
    %630 = vmatprep.subr.mxu0 0.0
    %631 = vmatpush1.msra.mxu0 %v628
    %632 = vmatprep.subr.mxu0 0.0
    %633 = vmatpush1.msra.mxu0 0.0
    %634 = vmatprep.subr.mxu0 0.0
    %635 = vmatpush1.msra.mxu0 0.0
    %636 = vmatprep.subr.mxu0 0.0
    %637 = vmatpush1.msra.mxu0 0.0
    %638 = vmatprep.subr.mxu0 0.0
    %639 = vmatpush1.msra.mxu0 0.0
    %640 = vmatprep.subr.mxu0 0.0
    %641 = vmatpush1.msra.mxu0 0.0
    %642 = vmatprep.subr.mxu0 0.0
    %643 = vmatpush1.msra.mxu0 0.0
    %644 = vmatprep.subr.mxu0 0.0
    %645 = vmatpush1.msra.mxu0 0.0
    %646 = vmatprep.subr.mxu0 0.0
    %647 = vmatpush1.msra.mxu0 0.0
    %648 = vmatprep.subr.mxu0 0.0
    %649 = vmatpush1.msra.mxu0 0.0
    %650 = vmatprep.subr.mxu0 0.0
    %651 = vmatpush1.msra.mxu0 0.0
    %652 = vmatprep.subr.mxu0 0.0
    %653 = vmatpush1.msra.mxu0 0.0
    %654 = vmatprep.subr.mxu0 0.0
    %655 = vmatpush1.msra.mxu0 0.0
    %656 = vmatprep.subr.mxu0 0.0
    %657 = vmatpush1.msra.mxu0 0.0
    %658 = vmatprep.subr.mxu0 0.0
    %659 = vmatpush1.msra.mxu0 0.0
    %660 = vmatprep.subr.mxu0 0.0
    %661 = vmatpush1.msra.mxu0 0.0
    %662 = vmatprep.subr.mxu0 0.0
    %663 = vmatpush1.msra.mxu0 0.0
    %664 = vmatprep.subr.mxu0 0.0
    %665 = vmatpush1.msra.mxu0 0.0
    %666 = vmatprep.subr.mxu0 0.0
    %667 = vmatpush1.msra.mxu0 0.0
    %668 = vmatprep.subr.mxu0 0.0
    %669 = vmatpush1.msra.mxu0 0.0
    %670 = vmatprep.subr.mxu0 0.0
    %671 = vmatpush1.msra.mxu0 0.0
    %672 = vmatprep.subr.mxu0 0.0
    %673 = vmatpush1.msra.mxu0 0.0
    %674 = vmatprep.subr.mxu0 0.0
    %675 = vmatpush1.msra.mxu0 0.0
    %676 = vmatprep.subr.mxu0 0.0
    %677 = vmatpush1.msra.mxu0 0.0
    %678 = vmatprep.subr.mxu0 0.0
    %679 = vmatpush1.msra.mxu0 0.0
    %680 = vmatprep.subr.mxu0 0.0
    %681 = vmatpush1.msra.mxu0 0.0
    %682 = vmatprep.subr.mxu0 0.0
    %683 = vmatpush1.msra.mxu0 0.0
    %684 = vmatprep.subr.mxu0 0.0
    %685 = vmatpush1.msra.mxu0 0.0
    %686 = vmatprep.subr.mxu0 0.0
    %687 = vmatpush1.msra.mxu0 0.0
    %688 = vmatprep.subr.mxu0 0.0
    %689 = vmatpush1.msra.mxu0 0.0
    %690 = vmatprep.subr.mxu0 0.0
    %691 = vmatpush1.msra.mxu0 0.0
    %692 = vmatprep.subr.mxu0 0.0
    %693 = vmatpush1.msra.mxu0 0.0
    %694 = vmatprep.mubr.f32.mxu0 0.0
    %695 = vmatmul.mubr.f32.gmra.mrb[0].mxu0 %v626
    %v696 = vpop.f32.mrb[0].mxu0
    %v697 = vadd.f32 0.0, %v696
    %v698 = vpop.f32.mrb[0].mxu0
    %699 = vdwg.mxu0
    %v700 = vmul.f32 %v697, 0.16666667
    %v701 = vlaneseq
    %v702 = vshrl.u32 %v701, 7
    %v703 = vsub.s32 0, %v702
    %v704 = vrot.slane %v559, %v703
    %v705 = vadd.f32 %v704, %v700
    %v706 = vmax.f32 %v488, %v705
    %s707 = scalar_lea.vmem %s1, 48
    %v708 = vld [vmem:[%s707] sm:$0xff]
    %v709 = vld [vmem:[%s707 + $0x8] sm:$0xff]
    %710 = vmatprep.subr.mxu0 0.0
    %711 = vmatpush1.msra.mxu0 %v708
    %712 = vmatprep.subr.mxu0 0.0
    %713 = vmatpush1.msra.mxu0 %v709
    %714 = vmatprep.subr.mxu0 0.0
    %715 = vmatpush1.msra.mxu0 0.0
    %716 = vmatprep.subr.mxu0 0.0
    %717 = vmatpush1.msra.mxu0 0.0
    %718 = vmatprep.subr.mxu0 0.0
    %719 = vmatpush1.msra.mxu0 0.0
    %720 = vmatprep.subr.mxu0 0.0
    %721 = vmatpush1.msra.mxu0 0.0
    %722 = vmatprep.subr.mxu0 0.0
    %723 = vmatpush1.msra.mxu0 0.0
    %724 = vmatprep.subr.mxu0 0.0
    %725 = vmatpush1.msra.mxu0 0.0
    %726 = vmatprep.subr.mxu0 0.0
    %727 = vmatpush1.msra.mxu0 0.0
    %728 = vmatprep.subr.mxu0 0.0
    %729 = vmatpush1.msra.mxu0 0.0
    %730 = vmatprep.subr.mxu0 0.0
    %731 = vmatpush1.msra.mxu0 0.0
    %732 = vmatprep.subr.mxu0 0.0
    %733 = vmatpush1.msra.mxu0 0.0
    %734 = vmatprep.subr.mxu0 0.0
    %735 = vmatpush1.msra.mxu0 0.0
    %736 = vmatprep.subr.mxu0 0.0
    %737 = vmatpush1.msra.mxu0 0.0
    %738 = vmatprep.subr.mxu0 0.0
    %739 = vmatpush1.msra.mxu0 0.0
    %740 = vmatprep.subr.mxu0 0.0
    %741 = vmatpush1.msra.mxu0 0.0
    %742 = vmatprep.subr.mxu0 0.0
    %743 = vmatpush1.msra.mxu0 0.0
    %744 = vmatprep.subr.mxu0 0.0
    %745 = vmatpush1.msra.mxu0 0.0
    %746 = vmatprep.subr.mxu0 0.0
    %747 = vmatpush1.msra.mxu0 0.0
    %748 = vmatprep.subr.mxu0 0.0
    %749 = vmatpush1.msra.mxu0 0.0
    %750 = vmatprep.subr.mxu0 0.0
    %751 = vmatpush1.msra.mxu0 0.0
    %752 = vmatprep.subr.mxu0 0.0
    %753 = vmatpush1.msra.mxu0 0.0
    %754 = vmatprep.subr.mxu0 0.0
    %755 = vmatpush1.msra.mxu0 0.0
    %756 = vmatprep.subr.mxu0 0.0
    %757 = vmatpush1.msra.mxu0 0.0
    %758 = vmatprep.subr.mxu0 0.0
    %759 = vmatpush1.msra.mxu0 0.0
    %760 = vmatprep.subr.mxu0 0.0
    %761 = vmatpush1.msra.mxu0 0.0
    %762 = vmatprep.subr.mxu0 0.0
    %763 = vmatpush1.msra.mxu0 0.0
    %764 = vmatprep.subr.mxu0 0.0
    %765 = vmatpush1.msra.mxu0 0.0
    %766 = vmatprep.subr.mxu0 0.0
    %767 = vmatpush1.msra.mxu0 0.0
    %768 = vmatprep.subr.mxu0 0.0
    %769 = vmatpush1.msra.mxu0 0.0
    %770 = vmatprep.subr.mxu0 0.0
    %771 = vmatpush1.msra.mxu0 0.0
    %772 = vmatprep.subr.mxu0 0.0
    %773 = vmatpush1.msra.mxu0 0.0
    %774 = vmatprep.mubr.f32.mxu0 0.0
    %775 = vmatmul.mubr.f32.gmra.mrb[0].mxu0 %v24
    %v776 = vpop.f32.mrb[0].mxu0
    %v777 = vadd.f32 0.0, %v776
    %v778 = vpop.f32.mrb[0].mxu0
    %779 = vdwg.mxu0
    %v780 = vadd.f32 %v777, %v104
    %v781 = vmax.f32 %v780, 0.0
    %vm782 = vcmp.ne.f32.partialorder %v780, %v780
    %v783 = vadd.f32 %v780, 0.0
    %v784 = vand.u32 2147483647, %v780
    %v785 = vsub.f32 0.0, %v784
    %v786 = vmul.f32 %v785, 1.442695
    %v787 = vpow.pop %v786
    %v788 = vadd.f32 %v787, 1.0
    %v789 = vlog2.pop %v788
    %v790 = vmul.f32 %v789, 0.6931472
    %v791 = vmul.f32 -0.5, %v787
    %v792 = vadd.f32 %v791, 1.0
    %v793 = vmul.f32 %v792, %v787
    %v794 = vand.u32 2147483647, %v787
    %vm795 = vcmp.lt.f32.partialorder %v794, 0.0004427343
    %v796 = vsel %vm795, %v793, %v790
    %v797 = vadd.f32 %v781, %v796
    %v798 = vsel %vm782, %v783, %v797
    %v799 = vadd.f32 %v777, %v133
    %v800 = vmax.f32 %v799, 0.0
    %vm801 = vcmp.ne.f32.partialorder %v799, %v799
    %v802 = vadd.f32 %v799, 0.0
    %v803 = vand.u32 2147483647, %v799
    %v804 = vsub.f32 0.0, %v803
    %v805 = vmul.f32 %v804, 1.442695
    %v806 = vpow.pop %v805
    %v807 = vadd.f32 %v806, 1.0
    %v808 = vlog2.pop %v807
    %v809 = vmul.f32 %v808, 0.6931472
    %v810 = vmul.f32 -0.5, %v806
    %v811 = vadd.f32 %v810, 1.0
    %v812 = vmul.f32 %v811, %v806
    %v813 = vand.u32 2147483647, %v806
    %vm814 = vcmp.lt.f32.partialorder %v813, 0.0004427343
    %v815 = vsel %vm814, %v812, %v809
    %v816 = vadd.f32 %v800, %v815
    %v817 = vsel %vm801, %v802, %v816
    %v818 = vadd.f32 %v798, %v817
    %v819 = vadd.f32 %v777, %v163
    %v820 = vmax.f32 %v819, 0.0
    %vm821 = vcmp.ne.f32.partialorder %v819, %v819
    %v822 = vadd.f32 %v819, 0.0
    %v823 = vand.u32 2147483647, %v819
    %v824 = vsub.f32 0.0, %v823
    %v825 = vmul.f32 %v824, 1.442695
    %v826 = vpow.pop %v825
    %v827 = vadd.f32 %v826, 1.0
    %v828 = vlog2.pop %v827
    %v829 = vmul.f32 %v828, 0.6931472
    %v830 = vmul.f32 -0.5, %v826
    %v831 = vadd.f32 %v830, 1.0
    %v832 = vmul.f32 %v831, %v826
    %v833 = vand.u32 2147483647, %v826
    %vm834 = vcmp.lt.f32.partialorder %v833, 0.0004427343
    %v835 = vsel %vm834, %v832, %v829
    %v836 = vadd.f32 %v820, %v835
    %v837 = vsel %vm821, %v822, %v836
    %v838 = vadd.f32 %v818, %v837
    %s839 = scalar_lea.vmem %s3, 12
    %v840 = vld [vmem:[%s839] sm:$0x7]
    %v842 = vrot.slane %v838, 1
    %v844 = vsel %vm188, %v840, 0
    %v846 = vsel %vm192, %v842, 0
    %848 = vmatprep.subr.mxu0 0.0
    %849 = vmatpush1.msra.mxu0 %v846
    %850 = vmatprep.subr.mxu0 0.0
    %851 = vmatpush1.msra.mxu0 0.0
    %852 = vmatprep.subr.mxu0 0.0
    %853 = vmatpush1.msra.mxu0 0.0
    %854 = vmatprep.subr.mxu0 0.0
    %855 = vmatpush1.msra.mxu0 0.0
    %856 = vmatprep.subr.mxu0 0.0
    %857 = vmatpush1.msra.mxu0 0.0
    %858 = vmatprep.subr.mxu0 0.0
    %859 = vmatpush1.msra.mxu0 0.0
    %860 = vmatprep.subr.mxu0 0.0
    %861 = vmatpush1.msra.mxu0 0.0
    %862 = vmatprep.subr.mxu0 0.0
    %863 = vmatpush1.msra.mxu0 0.0
    %864 = vmatprep.subr.mxu0 0.0
    %865 = vmatpush1.msra.mxu0 0.0
    %866 = vmatprep.subr.mxu0 0.0
    %867 = vmatpush1.msra.mxu0 0.0
    %868 = vmatprep.subr.mxu0 0.0
    %869 = vmatpush1.msra.mxu0 0.0
    %870 = vmatprep.subr.mxu0 0.0
    %871 = vmatpush1.msra.mxu0 0.0
    %872 = vmatprep.subr.mxu0 0.0
    %873 = vmatpush1.msra.mxu0 0.0
    %874 = vmatprep.subr.mxu0 0.0
    %875 = vmatpush1.msra.mxu0 0.0
    %876 = vmatprep.subr.mxu0 0.0
    %877 = vmatpush1.msra.mxu0 0.0
    %878 = vmatprep.subr.mxu0 0.0
    %879 = vmatpush1.msra.mxu0 0.0
    %880 = vmatprep.subr.mxu0 0.0
    %881 = vmatpush1.msra.mxu0 0.0
    %882 = vmatprep.subr.mxu0 0.0
    %883 = vmatpush1.msra.mxu0 0.0
    %884 = vmatprep.subr.mxu0 0.0
    %885 = vmatpush1.msra.mxu0 0.0
    %886 = vmatprep.subr.mxu0 0.0
    %887 = vmatpush1.msra.mxu0 0.0
    %888 = vmatprep.subr.mxu0 0.0
    %889 = vmatpush1.msra.mxu0 0.0
    %890 = vmatprep.subr.mxu0 0.0
    %891 = vmatpush1.msra.mxu0 0.0
    %892 = vmatprep.subr.mxu0 0.0
    %893 = vmatpush1.msra.mxu0 0.0
    %894 = vmatprep.subr.mxu0 0.0
    %895 = vmatpush1.msra.mxu0 0.0
    %896 = vmatprep.subr.mxu0 0.0
    %897 = vmatpush1.msra.mxu0 0.0
    %898 = vmatprep.subr.mxu0 0.0
    %899 = vmatpush1.msra.mxu0 0.0
    %900 = vmatprep.subr.mxu0 0.0
    %901 = vmatpush1.msra.mxu0 0.0
    %902 = vmatprep.subr.mxu0 0.0
    %903 = vmatpush1.msra.mxu0 0.0
    %904 = vmatprep.subr.mxu0 0.0
    %905 = vmatpush1.msra.mxu0 0.0
    %906 = vmatprep.subr.mxu0 0.0
    %907 = vmatpush1.msra.mxu0 0.0
    %908 = vmatprep.subr.mxu0 0.0
    %909 = vmatpush1.msra.mxu0 0.0
    %910 = vmatprep.subr.mxu0 0.0
    %911 = vmatpush1.msra.mxu0 0.0
    %912 = vmatprep.mubr.f32.mxu0 0.0
    %913 = vmatmul.mubr.f32.gmra.mrb[0].mxu0 %v844
    %v914 = vpop.f32.mrb[0].mxu0
    %v915 = vadd.f32 0.0, %v914
    %v916 = vpop.f32.mrb[0].mxu0
    %917 = vdwg.mxu0
    %v918 = vmul.f32 %v915, 0.16666667
    %v919 = vlaneseq
    %v920 = vshrl.u32 %v919, 7
    %v921 = vsub.s32 0, %v920
    %v922 = vrot.slane %v777, %v921
    %v923 = vadd.f32 %v922, %v918
    %v924 = vmax.f32 %v706, %v923
    %vm925 = vcmask 59392
    %v926 = vsel %vm925, %v924, 0.0
    %v927 = vrot.slane %v926, 4
    %v928 = vadd.f32 %v926, %v927
    %v929 = vrot.slane %v928, 2
    %v930 = vadd.f32 %v928, %v929
    %v931 = vrot.slane %v930, 1
    %v932 = vadd.f32 %v930, %v931
    %v933 = vrcp.pop 3.0
    %v934 = vmul.f32 %v932, %v933
    %vm935 = vcmask 57344
    %936 = vst.msk [vmem:[#allocation2] sm:$0x1] %vm935, %v934
    // Predicated region
    $region18: #{tpu_custom_call.1} parent=1 // pred_check
      _
    $region19: #{tpu_custom_call.1} parent=1 // pred_check_branch
      %938 = sbr.rel (0) target = $region21
    $region20: #{tpu_custom_call.1} parent=1 // pred_region
      %s940 = ssub.s32 16, 16
      %941 = vsyncadd [#allocation3], %s940
      %s943 = sshll.u32 [#allocation2], 4
      %s944 = int_to_ptr.vmem [resolvable:$true] %s943
      %946 = dma.vmem_to_hbm [thread:$0]  %s944, 16, %s4, [#allocation3]
    $region21: #{tpu_custom_call.1} parent=1 // pred_fallthru
      _
    // Predicated region
    $region22: #{tpu_custom_call.1} parent=1 // pred_check
      _
    $region23: #{tpu_custom_call.1} parent=1 // pred_check_branch
      %948 = sbr.rel (0) target = $region25
    $region24: #{tpu_custom_call.1} parent=1 // pred_region
      %949 = dma.done [#allocation3], 16
    $region25: #{tpu_custom_call.1} parent=1 // pred_fallthru
      _
    %950 = vsyncpa [#allocation3], 1

</llo_original>
